<compile_context>
chip_gen: v6e
topology: v6e:2x2x1
jax: 0.10.0
libtpu: 0.0.40
codegen_flags: <defaults>
</compile_context>

<pallas_src>
import jax
import jax.numpy as jnp
from jax.experimental import pallas as pl
from jax.experimental.pallas import tpu as pltpu


def _norm_kernel(scale_ref, shift_ref, x_ref, o_ref):
    # y = x * (1/std) + (-mean/std); scale/shift are (row_block, 1) and
    # broadcast across the lane dimension of the (row_block, lane_block) tile.
    o_ref[...] = x_ref[...] * scale_ref[...] + shift_ref[...]


def _round_up(v, m):
    return ((v + m - 1) // m) * m


def _pick_block(extent, unit, cap):
    """Largest multiple of `unit` that divides `extent` and is <= cap."""
    best = unit
    for cand in range(unit, min(extent, cap) + 1, unit):
        if extent % cand == 0:
            best = cand
    return best


def normalization(x, mean, std):
    """x: (N, C, H, W); mean/std: (C,).  Returns (x - mean[c]) / std[c]."""
    N, C, H, W = x.shape
    assert mean.shape == (C,) and std.shape == (C,)
    dtype = x.dtype

    R, L = N * C, H * W

    # Hoist all scalar math out of the kernel: y = x * scale + shift.
    scale_c = 1.0 / std.astype(jnp.float32)
    shift_c = -mean.astype(jnp.float32) * scale_c

    # Lane-dense 2-D layout, padded so every store is an unmasked full vst.
    Rp = _round_up(R, 8)
    Lp = _round_up(L, 128)

    lane_block = _pick_block(Lp, 128, 8192)   # lane-dense, 0.5 MB-class tiles
    row_block = _pick_block(Rp, 8, 16)        # keep 4x double-buffered blocks small (v7x)

    x2 = x.reshape(R, L)
    x2 = jnp.pad(x2, ((0, Rp - R), (0, Lp - L)))

    # Per-row affine params (row = n*C + c), padded with identity for the pad rows.
    scale_rows = jnp.pad(jnp.tile(scale_c, N), (0, Rp - R), constant_values=1.0)
    shift_rows = jnp.pad(jnp.tile(shift_c, N), (0, Rp - R), constant_values=0.0)
    scale_rows = scale_rows.reshape(Rp, 1).astype(dtype)
    shift_rows = shift_rows.reshape(Rp, 1).astype(dtype)

    grid = (Rp // row_block, Lp // lane_block)

    out2 = pl.pallas_call(
        _norm_kernel,
        out_shape=jax.ShapeDtypeStruct((Rp, Lp), dtype),
        grid=grid,
        in_specs=[
            pl.BlockSpec((row_block, 1), lambda i, j: (i, 0)),           # scale
            pl.BlockSpec((row_block, 1), lambda i, j: (i, 0)),           # shift
            pl.BlockSpec((row_block, lane_block), lambda i, j: (i, j)),  # x
        ],
        out_specs=pl.BlockSpec((row_block, lane_block), lambda i, j: (i, j)),
        compiler_params=pltpu.CompilerParams(
            dimension_semantics=("parallel", "parallel")),
    )(scale_rows, shift_rows, x2)

    return out2[:R, :L].reshape(N, C, H, W)


if __name__ == "__main__":
    # Deterministic parameters straight from the module definition.
    mean = jnp.array([0.485, 0.456, 0.406], dtype=jnp.float32)
    std = jnp.array([0.229, 0.224, 0.225], dtype=jnp.float32)

    # Small NCHW input consistent with the forward (3 channels, 16x16 spatial).
    key = jax.random.PRNGKey(0)
    x = jax.random.normal(key, (2, 3, 16, 16), dtype=jnp.float32)

    out = normalization(x, mean, std)
    out = jax.block_until_ready(out)

    # Pure-JAX reference check (module semantics: (x - mean) / std).
    ref = (x - mean[None, :, None, None]) / std[None, :, None, None]
    assert out.shape == ref.shape and out.dtype == ref.dtype
    # x*scale + shift vs (x-m)/s differ by a couple of f32 ulps.
    assert jnp.allclose(out, ref, rtol=1e-5, atol=1e-6)

    print("KERNEL_OK")
</pallas_src>

<mosaic_0001>
module attributes {stable_mosaic.version = 11 : i64} {
  func.func @_norm_kernel(%arg0: i32, %arg1: i32, %arg2: memref<8x1xf32, #tpu.memory_space<vmem>>, %arg3: memref<8x1xf32, #tpu.memory_space<vmem>>, %arg4: memref<8x256xf32, #tpu.memory_space<vmem>>, %arg5: memref<8x256xf32, #tpu.memory_space<vmem>>) attributes {dimension_semantics = [#tpu.dimension_semantics<parallel>, #tpu.dimension_semantics<parallel>], iteration_bounds = array<i64: 1, 1>, scalar_prefetch = 0 : i64, scratch_operands = 0 : i64, tpu.core_type = #tpu.core_type<tc>, window_params = [{transform_indices = @transform_0, window_bounds = array<i64: 8, 1>}, {transform_indices = @transform_1, window_bounds = array<i64: 8, 1>}, {transform_indices = @transform_2, window_bounds = array<i64: 8, 256>}, {transform_indices = @transform_3, window_bounds = array<i64: 8, 256>}]} {
    %c0 = arith.constant 0 : index
    %c0_0 = arith.constant 0 : index
    %0 = vector.load %arg4[%c0, %c0_0] : memref<8x256xf32, #tpu.memory_space<vmem>>, vector<8x256xf32>
    %c0_1 = arith.constant 0 : index
    %c0_2 = arith.constant 0 : index
    %1 = vector.load %arg2[%c0_1, %c0_2] : memref<8x1xf32, #tpu.memory_space<vmem>>, vector<8x1xf32>
    %2 = vector.broadcast %1 : vector<8x1xf32> to vector<8x256xf32>
    %3 = arith.mulf %0, %2 : vector<8x256xf32>
    %c0_3 = arith.constant 0 : index
    %c0_4 = arith.constant 0 : index
    %4 = vector.load %arg3[%c0_3, %c0_4] : memref<8x1xf32, #tpu.memory_space<vmem>>, vector<8x1xf32>
    %5 = vector.broadcast %4 : vector<8x1xf32> to vector<8x256xf32>
    %6 = arith.addf %3, %5 : vector<8x256xf32>
    %c0_5 = arith.constant 0 : index
    %c0_6 = arith.constant 0 : index
    %7 = vector.load %arg5[%c0_5, %c0_6] : memref<8x256xf32, #tpu.memory_space<vmem>>, vector<8x256xf32>
    tpu.vector_store %arg5[%c0_5, %c0_6], %6 {strides = array<i32>} : memref<8x256xf32, #tpu.memory_space<vmem>>, vector<8x256xf32>,
    return
  }
  func.func @transform_0(%arg0: i32, %arg1: i32) -> (i32, i32) {
    %c0_i32 = arith.constant 0 : i32
    %c0_i32_0 = arith.constant 0 : i32
    return %arg0, %c0_i32 : i32, i32
  }
  func.func @transform_1(%arg0: i32, %arg1: i32) -> (i32, i32) {
    %c0_i32 = arith.constant 0 : i32
    %c0_i32_0 = arith.constant 0 : i32
    return %arg0, %c0_i32 : i32, i32
  }
  func.func @transform_2(%arg0: i32, %arg1: i32) -> (i32, i32) {
    %c0_i32 = arith.constant 0 : i32
    return %arg0, %arg1 : i32, i32
  }
  func.func @transform_3(%arg0: i32, %arg1: i32) -> (i32, i32) {
    %c0_i32 = arith.constant 0 : i32
    return %arg0, %arg1 : i32, i32
  }
}

</mosaic_0001>

<llo_original>
// kernel: tpu_custom_call.1
$region0: #{tpu_custom_call.1}
  #allocation0 [shape = 'u32[]', space=smem, size = 0x4, offset = 0x4, fixed_abs, tag = 'smem constant byte address 0x4 - core index']
  #allocation1 [shape = 'u32[144,128]{1,0:T(1,128)}', space=vmem, size = 0x12000, scoped, tag = 'internal scratch']
  %s0 = inlined_call_operand.vmem [shape: f32[8,1], index: 0, kind: input, shape index: {}]
  %s1 = inlined_call_operand.vmem [shape: f32[8,1], index: 1, kind: input, shape index: {}]
  %s2 = inlined_call_operand.vmem [shape: f32[8,256], index: 2, kind: input, shape index: {}]
  %s3 = inlined_call_operand.hbm [shape: f32[8,256], index: 3, kind: output, shape index: {}]
  %s4 = sld [smem:[#allocation0]]
  $region22: #{tpu_custom_call.1} parent=0
    _
  %s6 = ssub.s32 1, %s4
  %s7 = scalar_select 0, %s6, %s4
  $region1: #{tpu_custom_call.1} parent=0
    #allocation2 [shape = 'u8[8192]{0}', space=vmem, size = 0x2000, scoped, tag = 'output window, operand 0, single buffered']
    #allocation3 [shape = 's32[1]{0}', space=sflag, size = 0x4, scoped, tag = 'scoped memory for tpu_custom_call.1']
    %8 = vsyncpa [#allocation3], 0
    // Predicated region
    $region2: #{tpu_custom_call.1} parent=1 // pred_check
      _
    $region3: #{tpu_custom_call.1} parent=1 // pred_check_branch
      %10 = sbr.rel (0) target = $region5
    $region4: #{tpu_custom_call.1} parent=1 // pred_region
      _
    $region5: #{tpu_custom_call.1} parent=1 // pred_fallthru
      _
    // Predicated region
    $region6: #{tpu_custom_call.1} parent=1 // pred_check
      _
    $region7: #{tpu_custom_call.1} parent=1 // pred_check_branch
      %12 = sbr.rel (0) target = $region9
    $region8: #{tpu_custom_call.1} parent=1 // pred_region
      _
    $region9: #{tpu_custom_call.1} parent=1 // pred_fallthru
      _
    // Predicated region
    $region10: #{tpu_custom_call.1} parent=1 // pred_check
      _
    $region11: #{tpu_custom_call.1} parent=1 // pred_check_branch
      %14 = sbr.rel (0) target = $region13
    $region12: #{tpu_custom_call.1} parent=1 // pred_region
      _
    $region13: #{tpu_custom_call.1} parent=1 // pred_fallthru
      _
    %v15 = vld [vmem:[%s2] sm:$0xff]
    %v16 = vld [vmem:[%s2 + $0x8] sm:$0xff]
    %v17 = vld [vmem:[%s0] sm:$0xff]
    %19 = vset.pattern.permute.xlu0 0
    %20 = vperm.xlu0 %19, %v17
    %v21 = vpop.permute.xlu0 %20
    %v23 = vmul.f32 %v15, %v21
    %v24 = vmul.f32 %v16, %v21
    %v25 = vld [vmem:[%s1] sm:$0xff]
    %27 = vset.pattern.permute.xlu0 0
    %28 = vperm.xlu0 %27, %v25
    %v29 = vpop.permute.xlu0 %28
    %v31 = vadd.f32 %v23, %v29
    %v32 = vadd.f32 %v24, %v29
    %33 = vst [vmem:[#allocation2] sm:$0xff] %v31
    %34 = vst [vmem:[#allocation2 + $0x8] sm:$0xff] %v32
    // Predicated region
    $region14: #{tpu_custom_call.1} parent=1 // pred_check
      _
    $region15: #{tpu_custom_call.1} parent=1 // pred_check_branch
      %36 = sbr.rel (0) target = $region17
    $region16: #{tpu_custom_call.1} parent=1 // pred_region
      %s38 = ssub.s32 256, 256
      %39 = vsyncadd [#allocation3], %s38
      %s41 = sshll.u32 [#allocation2], 4
      %s42 = int_to_ptr.vmem [resolvable:$true] %s41
      %44 = dma.vmem_to_hbm [thread:$0]  %s42, 256, %s3, [#allocation3]
    $region17: #{tpu_custom_call.1} parent=1 // pred_fallthru
      _
    // Predicated region
    $region18: #{tpu_custom_call.1} parent=1 // pred_check
      _
    $region19: #{tpu_custom_call.1} parent=1 // pred_check_branch
      %46 = sbr.rel (0) target = $region21
    $region20: #{tpu_custom_call.1} parent=1 // pred_region
      %47 = dma.done [#allocation3], 256
    $region21: #{tpu_custom_call.1} parent=1 // pred_fallthru
      _
    %48 = vsyncpa [#allocation3], 1

</llo_original>
